<compile_context>
chip_gen: v7x
topology: tpu7x:2x2x1
jax: 0.10.0
libtpu: 0.0.40
codegen_flags: <defaults>
</compile_context>

<pallas_src>
import math

import jax
import jax.numpy as jnp
from jax.experimental import pallas as pl
from jax.experimental.pallas import tpu as pltpu


def _attn_kernel(x_ref, o_ref):
    # x_ref: (B*H, T, D)  -- all heads of all batches (query == key == value)
    # o_ref: (B*H, T)
    x = x_ref[...]
    scale = 1.0 / math.sqrt(float(x.shape[-1]))

    # key.transpose(-1,-2).sum(3).unsqueeze(2)  ==  sum over seq (T); fold the
    # 1/sqrt(D) scale into the small broadcast operand (T x fewer multiplies).
    key_sum = jnp.sum(x, axis=1, keepdims=True) * scale      # (BH, 1, D)

    # tanh output is bounded in [-1, 1] so exp cannot overflow:
    # no max-subtraction needed for the softmax over head_dim.
    attn = jnp.tanh(x * key_sum)                             # (BH, T, D)
    e = jnp.exp(attn)
    # approx=False keeps the result within 1e-5 of the XLA reference; flip to
    # approx=True to move the divide onto the otherwise-idle EUP if a looser
    # tolerance is acceptable.
    attn = e * pl.reciprocal(jnp.sum(e, axis=-1, keepdims=True), approx=False)

    t_out = attn * x                                         # (BH, T, D)

    # The module's second softmax is over a size-1 axis -> exactly 1.0, so
    # out == t_out.sum(-1); the input_proj (w, b) weights are dead code.
    o_ref[...] = jnp.sum(t_out, axis=-1)                     # (BH, T)


def self_attention_layer(x, w=None, b=None, num_heads=8):
    """x: (B, T, model_dim) -> (B, num_heads, T), matching the PyTorch module.

    `w`, `b` (input_proj) are accepted for interface parity but have no
    mathematical effect on the output (size-1 softmax == 1.0 exactly).
    """
    del w, b
    B, T, M = x.shape
    H = num_heads
    D = M // H
    # Head split in the wrapper (tiny XLA op): (B, T, H, D) -> (B, H, T, D)
    # -> fold batch and head into one leading axis for the kernel.
    xh = jnp.transpose(x.reshape(B, T, H, D), (0, 2, 1, 3)).reshape(B * H, T, D)

    out = pl.pallas_call(
        _attn_kernel,
        out_shape=jax.ShapeDtypeStruct((B * H, T), x.dtype),
        # Single invocation (no grid): the whole problem is a few KB, so one
        # full-array VMEM block per operand beats an 8-step per-head grid.
        in_specs=[pl.BlockSpec(memory_space=pltpu.MemorySpace.VMEM)],
        out_specs=pl.BlockSpec(memory_space=pltpu.MemorySpace.VMEM),
    )(xh)
    # TODO(synk): if B*H*T grows, emit a lane-dense (>=128-wide last dim)
    # output from the kernel; at 128 output floats the in-kernel relayout
    # would cost more than the two masked stores it saves.
    return out.reshape(B, H, T)


def _reference(x, w, b, num_heads):
    """Pure-JAX transcription of the PyTorch forward, for verification."""
    B, T, M = x.shape
    H = num_heads
    D = M // H
    q = jnp.transpose(x.reshape(B, T, H, D), (2, 0, 1, 3))     # (H,B,T,D)
    k = q
    v = q
    key_sum = jnp.sum(k, axis=2)[:, :, None, :]                # (H,B,1,D)
    attn = jnp.tanh(q * key_sum / jnp.sqrt(jnp.float32(D)))
    attn = jax.nn.softmax(attn, axis=-1)
    t_out = attn * v
    vq = t_out.sum(axis=2)                                     # (H,B,D)
    vk = vq
    vv = jnp.transpose(t_out.sum(axis=3), (1, 0, 2))           # (B,H,T)
    s = jnp.tanh((vq * vk) @ w.T + b)                          # (H,B,1)
    s = jax.nn.softmax(s, axis=-1)
    s = jnp.transpose(s, (1, 0, 2))                            # (B,H,1)
    return vv * s


if __name__ == "__main__":
    # model_dim = num_heads * 10 (head_dim fixed to 10 by nn.Linear(10, 1))
    B, T, H, Dh = 2, 8, 8, 10
    model_dim = H * Dh

    key = jax.random.PRNGKey(0)
    kx, kw, kb = jax.random.split(key, 3)
    x = jax.random.normal(kx, (B, T, model_dim), dtype=jnp.float32)

    # deterministic init of input_proj = nn.Linear(10, 1): W (1,10), b (1,)
    bound = 1.0 / math.sqrt(Dh)
    w = jax.random.uniform(kw, (1, Dh), minval=-bound, maxval=bound,
                           dtype=jnp.float32)
    bias = jax.random.uniform(kb, (1,), minval=-bound, maxval=bound,
                              dtype=jnp.float32)

    out = self_attention_layer(x, w, bias, num_heads=H)
    out = jax.block_until_ready(out)

    ref = _reference(x, w, bias, H)
    assert out.shape == (B, H, T), out.shape
    assert jnp.allclose(out, ref, atol=1e-5, rtol=1e-5), \
        float(jnp.max(jnp.abs(out - ref)))

    print("KERNEL_OK")
</pallas_src>

<mosaic_0001>
module attributes {stable_mosaic.version = 11 : i64} {
  func.func @_attn_kernel(%arg0: memref<16x8x10xf32, #tpu.memory_space<vmem>>, %arg1: memref<16x8xf32, #tpu.memory_space<vmem>>) attributes {dimension_semantics = [], scalar_prefetch = 0 : i64, scratch_operands = 0 : i64, tpu.core_type = #tpu.core_type<tc>} {
    %c0 = arith.constant 0 : index
    %c0_0 = arith.constant 0 : index
    %c0_1 = arith.constant 0 : index
    %0 = vector.load %arg0[%c0, %c0_0, %c0_1] : memref<16x8x10xf32, #tpu.memory_space<vmem>>, vector<16x8x10xf32>
    %cst = arith.constant dense<0.000000e+00> : vector<16x10xf32>
    %1 = vector.multi_reduction <add>, %0, %cst [1] : vector<16x8x10xf32> to vector<16x10xf32>
    %2 = vector.shape_cast %1 : vector<16x10xf32> to vector<16x1x10xf32>
    %cst_2 = arith.constant 0.316227764 : f32
    %3 = vector.broadcast %cst_2 : f32 to vector<16x1x10xf32>
    %4 = arith.mulf %2, %3 : vector<16x1x10xf32>
    %5 = vector.broadcast %4 : vector<16x1x10xf32> to vector<16x8x10xf32>
    %6 = arith.mulf %0, %5 : vector<16x8x10xf32>
    %7 = math.tanh %6 : vector<16x8x10xf32>
    %8 = math.exp %7 : vector<16x8x10xf32>
    %cst_3 = arith.constant dense<0.000000e+00> : vector<16x8xf32>
    %9 = vector.multi_reduction <add>, %8, %cst_3 [2] : vector<16x8x10xf32> to vector<16x8xf32>
    %10 = vector.shape_cast %9 : vector<16x8xf32> to vector<16x8x1xf32>
    %11 = tpu.reciprocal %10 : vector<16x8x1xf32> -> vector<16x8x1xf32>
    %12 = vector.broadcast %11 : vector<16x8x1xf32> to vector<16x8x10xf32>
    %13 = arith.mulf %8, %12 : vector<16x8x10xf32>
    %14 = arith.mulf %13, %0 : vector<16x8x10xf32>
    %cst_4 = arith.constant dense<0.000000e+00> : vector<16x8xf32>
    %15 = vector.multi_reduction <add>, %14, %cst_4 [2] : vector<16x8x10xf32> to vector<16x8xf32>
    %c0_5 = arith.constant 0 : index
    %c0_6 = arith.constant 0 : index
    %16 = vector.load %arg1[%c0_5, %c0_6] : memref<16x8xf32, #tpu.memory_space<vmem>>, vector<16x8xf32>
    tpu.vector_store %arg1[%c0_5, %c0_6], %15 {strides = array<i32>} : memref<16x8xf32, #tpu.memory_space<vmem>>, vector<16x8xf32>,
    return
  }
}

</mosaic_0001>

<llo_original>
// kernel: tpu_custom_call.1
$region0: #{tpu_custom_call.1}
  #allocation0 [shape = 'u32[]', space=smem, size = 0x4, offset = 0x4, fixed_abs, tag = 'smem constant byte address 0x4 - core index']
  #allocation1 [shape = 'u32[144,128]{1,0:T(1,128)}', space=vmem, size = 0x12000, scoped, tag = 'internal scratch']
  %s0 = inlined_call_operand.vmem [shape: f32[16,8,10], index: 0, kind: input, shape index: {}]
  %s1 = inlined_call_operand.vmem [shape: f32[16,8], index: 1, kind: output, shape index: {}]
  %s2 = sld [smem:[#allocation0]]
  $region14: #{tpu_custom_call.1} parent=0
    _
  %s4 = ssub.s32 1, %s2
  %s5 = scalar_select 0, %s4, %s2
  // Predicated region
  $region2: #{tpu_custom_call.1} parent=0 // pred_check
    _
  $region3: #{tpu_custom_call.1} parent=0 // pred_check_branch
    %7 = sbr.rel (0) target = $region5
  $region4: #{tpu_custom_call.1} parent=0 // pred_region
    _
  $region5: #{tpu_custom_call.1} parent=0 // pred_fallthru
    _
  %v8 = vld [vmem:[%s0] sm:$0xff]
  %v9 = vld [vmem:[%s0 + $0x8] sm:$0xff]
  %v10 = vld [vmem:[%s0 + $0x10] sm:$0xff]
  %v11 = vld [vmem:[%s0 + $0x18] sm:$0xff]
  %v12 = vld [vmem:[%s0 + $0x20] sm:$0xff]
  %v13 = vld [vmem:[%s0 + $0x28] sm:$0xff]
  %v14 = vld [vmem:[%s0 + $0x30] sm:$0xff]
  %v15 = vld [vmem:[%s0 + $0x38] sm:$0xff]
  %v16 = vld [vmem:[%s0 + $0x40] sm:$0xff]
  %v17 = vld [vmem:[%s0 + $0x48] sm:$0xff]
  %v18 = vld [vmem:[%s0 + $0x50] sm:$0xff]
  %v19 = vld [vmem:[%s0 + $0x58] sm:$0xff]
  %v20 = vld [vmem:[%s0 + $0x60] sm:$0xff]
  %v21 = vld [vmem:[%s0 + $0x68] sm:$0xff]
  %v22 = vld [vmem:[%s0 + $0x70] sm:$0xff]
  %v23 = vld [vmem:[%s0 + $0x78] sm:$0xff]
  %vm24 = vcmask 80896
  %v25 = vsel %vm24, %v8, 0.0
  %v26 = vrot.slane %v25, 4
  %v27 = vadd.f32 %v25, %v26
  %v28 = vrot.slane %v27, 2
  %v29 = vadd.f32 %v27, %v28
  %v30 = vrot.slane %v29, 1
  %v31 = vadd.f32 %v29, %v30
  %v32 = vsel %vm24, %v9, 0.0
  %v33 = vrot.slane %v32, 4
  %v34 = vadd.f32 %v32, %v33
  %v35 = vrot.slane %v34, 2
  %v36 = vadd.f32 %v34, %v35
  %v37 = vrot.slane %v36, 1
  %v38 = vadd.f32 %v36, %v37
  %v39 = vsel %vm24, %v10, 0.0
  %v40 = vrot.slane %v39, 4
  %v41 = vadd.f32 %v39, %v40
  %v42 = vrot.slane %v41, 2
  %v43 = vadd.f32 %v41, %v42
  %v44 = vrot.slane %v43, 1
  %v45 = vadd.f32 %v43, %v44
  %v46 = vsel %vm24, %v11, 0.0
  %v47 = vrot.slane %v46, 4
  %v48 = vadd.f32 %v46, %v47
  %v49 = vrot.slane %v48, 2
  %v50 = vadd.f32 %v48, %v49
  %v51 = vrot.slane %v50, 1
  %v52 = vadd.f32 %v50, %v51
  %v53 = vsel %vm24, %v12, 0.0
  %v54 = vrot.slane %v53, 4
  %v55 = vadd.f32 %v53, %v54
  %v56 = vrot.slane %v55, 2
  %v57 = vadd.f32 %v55, %v56
  %v58 = vrot.slane %v57, 1
  %v59 = vadd.f32 %v57, %v58
  %v60 = vsel %vm24, %v13, 0.0
  %v61 = vrot.slane %v60, 4
  %v62 = vadd.f32 %v60, %v61
  %v63 = vrot.slane %v62, 2
  %v64 = vadd.f32 %v62, %v63
  %v65 = vrot.slane %v64, 1
  %v66 = vadd.f32 %v64, %v65
  %v67 = vsel %vm24, %v14, 0.0
  %v68 = vrot.slane %v67, 4
  %v69 = vadd.f32 %v67, %v68
  %v70 = vrot.slane %v69, 2
  %v71 = vadd.f32 %v69, %v70
  %v72 = vrot.slane %v71, 1
  %v73 = vadd.f32 %v71, %v72
  %v74 = vsel %vm24, %v15, 0.0
  %v75 = vrot.slane %v74, 4
  %v76 = vadd.f32 %v74, %v75
  %v77 = vrot.slane %v76, 2
  %v78 = vadd.f32 %v76, %v77
  %v79 = vrot.slane %v78, 1
  %v80 = vadd.f32 %v78, %v79
  %v81 = vsel %vm24, %v16, 0.0
  %v82 = vrot.slane %v81, 4
  %v83 = vadd.f32 %v81, %v82
  %v84 = vrot.slane %v83, 2
  %v85 = vadd.f32 %v83, %v84
  %v86 = vrot.slane %v85, 1
  %v87 = vadd.f32 %v85, %v86
  %v88 = vsel %vm24, %v17, 0.0
  %v89 = vrot.slane %v88, 4
  %v90 = vadd.f32 %v88, %v89
  %v91 = vrot.slane %v90, 2
  %v92 = vadd.f32 %v90, %v91
  %v93 = vrot.slane %v92, 1
  %v94 = vadd.f32 %v92, %v93
  %v95 = vsel %vm24, %v18, 0.0
  %v96 = vrot.slane %v95, 4
  %v97 = vadd.f32 %v95, %v96
  %v98 = vrot.slane %v97, 2
  %v99 = vadd.f32 %v97, %v98
  %v100 = vrot.slane %v99, 1
  %v101 = vadd.f32 %v99, %v100
  %v102 = vsel %vm24, %v19, 0.0
  %v103 = vrot.slane %v102, 4
  %v104 = vadd.f32 %v102, %v103
  %v105 = vrot.slane %v104, 2
  %v106 = vadd.f32 %v104, %v105
  %v107 = vrot.slane %v106, 1
  %v108 = vadd.f32 %v106, %v107
  %v109 = vsel %vm24, %v20, 0.0
  %v110 = vrot.slane %v109, 4
  %v111 = vadd.f32 %v109, %v110
  %v112 = vrot.slane %v111, 2
  %v113 = vadd.f32 %v111, %v112
  %v114 = vrot.slane %v113, 1
  %v115 = vadd.f32 %v113, %v114
  %v116 = vsel %vm24, %v21, 0.0
  %v117 = vrot.slane %v116, 4
  %v118 = vadd.f32 %v116, %v117
  %v119 = vrot.slane %v118, 2
  %v120 = vadd.f32 %v118, %v119
  %v121 = vrot.slane %v120, 1
  %v122 = vadd.f32 %v120, %v121
  %v123 = vsel %vm24, %v22, 0.0
  %v124 = vrot.slane %v123, 4
  %v125 = vadd.f32 %v123, %v124
  %v126 = vrot.slane %v125, 2
  %v127 = vadd.f32 %v125, %v126
  %v128 = vrot.slane %v127, 1
  %v129 = vadd.f32 %v127, %v128
  %v130 = vsel %vm24, %v23, 0.0
  %v131 = vrot.slane %v130, 4
  %v132 = vadd.f32 %v130, %v131
  %v133 = vrot.slane %v132, 2
  %v134 = vadd.f32 %v132, %v133
  %v135 = vrot.slane %v134, 1
  %v136 = vadd.f32 %v134, %v135
  %v137 = vmul.f32 %v31, 0.31622776
  %v138 = vmul.f32 %v38, 0.31622776
  %v139 = vmul.f32 %v45, 0.31622776
  %v140 = vmul.f32 %v52, 0.31622776
  %v141 = vmul.f32 %v59, 0.31622776
  %v142 = vmul.f32 %v66, 0.31622776
  %v143 = vmul.f32 %v73, 0.31622776
  %v144 = vmul.f32 %v80, 0.31622776
  %v145 = vmul.f32 %v87, 0.31622776
  %v146 = vmul.f32 %v94, 0.31622776
  %v147 = vmul.f32 %v101, 0.31622776
  %v148 = vmul.f32 %v108, 0.31622776
  %v149 = vmul.f32 %v115, 0.31622776
  %v150 = vmul.f32 %v122, 0.31622776
  %v151 = vmul.f32 %v129, 0.31622776
  %v152 = vmul.f32 %v136, 0.31622776
  %v153 = vmul.f32 %v8, %v137
  %v154 = vmul.f32 %v9, %v138
  %v155 = vmul.f32 %v10, %v139
  %v156 = vmul.f32 %v11, %v140
  %v157 = vmul.f32 %v12, %v141
  %v158 = vmul.f32 %v13, %v142
  %v159 = vmul.f32 %v14, %v143
  %v160 = vmul.f32 %v15, %v144
  %v161 = vmul.f32 %v16, %v145
  %v162 = vmul.f32 %v17, %v146
  %v163 = vmul.f32 %v18, %v147
  %v164 = vmul.f32 %v19, %v148
  %v165 = vmul.f32 %v20, %v149
  %v166 = vmul.f32 %v21, %v150
  %v167 = vmul.f32 %v22, %v151
  %v168 = vmul.f32 %v23, %v152
  %v169 = vtanh.pop %v153
  %v170 = vtanh.pop %v154
  %v171 = vtanh.pop %v155
  %v172 = vtanh.pop %v156
  %v173 = vtanh.pop %v157
  %v174 = vtanh.pop %v158
  %v175 = vtanh.pop %v159
  %v176 = vtanh.pop %v160
  %v177 = vtanh.pop %v161
  %v178 = vtanh.pop %v162
  %v179 = vtanh.pop %v163
  %v180 = vtanh.pop %v164
  %v181 = vtanh.pop %v165
  %v182 = vtanh.pop %v166
  %v183 = vtanh.pop %v167
  %v184 = vtanh.pop %v168
  %v185 = vmul.f32 %v169, 1.442695
  %v186 = vpow.pop %v185
  %v187 = vmul.f32 %v170, 1.442695
  %v188 = vpow.pop %v187
  %v189 = vmul.f32 %v171, 1.442695
  %v190 = vpow.pop %v189
  %v191 = vmul.f32 %v172, 1.442695
  %v192 = vpow.pop %v191
  %v193 = vmul.f32 %v173, 1.442695
  %v194 = vpow.pop %v193
  %v195 = vmul.f32 %v174, 1.442695
  %v196 = vpow.pop %v195
  %v197 = vmul.f32 %v175, 1.442695
  %v198 = vpow.pop %v197
  %v199 = vmul.f32 %v176, 1.442695
  %v200 = vpow.pop %v199
  %v201 = vmul.f32 %v177, 1.442695
  %v202 = vpow.pop %v201
  %v203 = vmul.f32 %v178, 1.442695
  %v204 = vpow.pop %v203
  %v205 = vmul.f32 %v179, 1.442695
  %v206 = vpow.pop %v205
  %v207 = vmul.f32 %v180, 1.442695
  %v208 = vpow.pop %v207
  %v209 = vmul.f32 %v181, 1.442695
  %v210 = vpow.pop %v209
  %v211 = vmul.f32 %v182, 1.442695
  %v212 = vpow.pop %v211
  %v213 = vmul.f32 %v183, 1.442695
  %v214 = vpow.pop %v213
  %v215 = vmul.f32 %v184, 1.442695
  %v216 = vpow.pop %v215
  %v217 = vsel %vm24, %v186, 0.0
  %218 = vadd.xlane.f32.xlu0 %v217
  %v219 = vpop.xlane.xlu0 %218
  %v220 = vsel %vm24, %v188, 0.0
  %221 = vadd.xlane.f32.xlu0 %v220
  %v222 = vpop.xlane.xlu0 %221
  %v223 = vsel %vm24, %v190, 0.0
  %224 = vadd.xlane.f32.xlu0 %v223
  %v225 = vpop.xlane.xlu0 %224
  %v226 = vsel %vm24, %v192, 0.0
  %227 = vadd.xlane.f32.xlu0 %v226
  %v228 = vpop.xlane.xlu0 %227
  %v229 = vsel %vm24, %v194, 0.0
  %230 = vadd.xlane.f32.xlu0 %v229
  %v231 = vpop.xlane.xlu0 %230
  %v232 = vsel %vm24, %v196, 0.0
  %233 = vadd.xlane.f32.xlu0 %v232
  %v234 = vpop.xlane.xlu0 %233
  %v235 = vsel %vm24, %v198, 0.0
  %236 = vadd.xlane.f32.xlu0 %v235
  %v237 = vpop.xlane.xlu0 %236
  %v238 = vsel %vm24, %v200, 0.0
  %239 = vadd.xlane.f32.xlu0 %v238
  %v240 = vpop.xlane.xlu0 %239
  %v241 = vsel %vm24, %v202, 0.0
  %242 = vadd.xlane.f32.xlu0 %v241
  %v243 = vpop.xlane.xlu0 %242
  %v244 = vsel %vm24, %v204, 0.0
  %245 = vadd.xlane.f32.xlu0 %v244
  %v246 = vpop.xlane.xlu0 %245
  %v247 = vsel %vm24, %v206, 0.0
  %248 = vadd.xlane.f32.xlu0 %v247
  %v249 = vpop.xlane.xlu0 %248
  %v250 = vsel %vm24, %v208, 0.0
  %251 = vadd.xlane.f32.xlu0 %v250
  %v252 = vpop.xlane.xlu0 %251
  %v253 = vsel %vm24, %v210, 0.0
  %254 = vadd.xlane.f32.xlu0 %v253
  %v255 = vpop.xlane.xlu0 %254
  %v256 = vsel %vm24, %v212, 0.0
  %257 = vadd.xlane.f32.xlu0 %v256
  %v258 = vpop.xlane.xlu0 %257
  %v259 = vsel %vm24, %v214, 0.0
  %260 = vadd.xlane.f32.xlu0 %v259
  %v261 = vpop.xlane.xlu0 %260
  %v262 = vsel %vm24, %v216, 0.0
  %263 = vadd.xlane.f32.xlu0 %v262
  %v264 = vpop.xlane.xlu0 %263
  %v265 = vrcp.pop %v219
  %v266 = vrcp.pop %v222
  %v267 = vrcp.pop %v225
  %v268 = vrcp.pop %v228
  %v269 = vrcp.pop %v231
  %v270 = vrcp.pop %v234
  %v271 = vrcp.pop %v237
  %v272 = vrcp.pop %v240
  %v273 = vrcp.pop %v243
  %v274 = vrcp.pop %v246
  %v275 = vrcp.pop %v249
  %v276 = vrcp.pop %v252
  %v277 = vrcp.pop %v255
  %v278 = vrcp.pop %v258
  %v279 = vrcp.pop %v261
  %v280 = vrcp.pop %v264
  %v281 = vmul.f32 %v186, %v265
  %v282 = vmul.f32 %v188, %v266
  %v283 = vmul.f32 %v190, %v267
  %v284 = vmul.f32 %v192, %v268
  %v285 = vmul.f32 %v194, %v269
  %v286 = vmul.f32 %v196, %v270
  %v287 = vmul.f32 %v198, %v271
  %v288 = vmul.f32 %v200, %v272
  %v289 = vmul.f32 %v202, %v273
  %v290 = vmul.f32 %v204, %v274
  %v291 = vmul.f32 %v206, %v275
  %v292 = vmul.f32 %v208, %v276
  %v293 = vmul.f32 %v210, %v277
  %v294 = vmul.f32 %v212, %v278
  %v295 = vmul.f32 %v214, %v279
  %v296 = vmul.f32 %v216, %v280
  %v297 = vmul.f32 %v281, %v8
  %v298 = vmul.f32 %v282, %v9
  %v299 = vmul.f32 %v283, %v10
  %v300 = vmul.f32 %v284, %v11
  %v301 = vmul.f32 %v285, %v12
  %v302 = vmul.f32 %v286, %v13
  %v303 = vmul.f32 %v287, %v14
  %v304 = vmul.f32 %v288, %v15
  %v305 = vmul.f32 %v289, %v16
  %v306 = vmul.f32 %v290, %v17
  %v307 = vmul.f32 %v291, %v18
  %v308 = vmul.f32 %v292, %v19
  %v309 = vmul.f32 %v293, %v20
  %v310 = vmul.f32 %v294, %v21
  %v311 = vmul.f32 %v295, %v22
  %v312 = vmul.f32 %v296, %v23
  %v313 = vsel %vm24, %v297, 0.0
  %314 = vadd.xlane.f32.xlu0 %v313
  %v315 = vpop.xlane.xlu0 %314
  %v316 = vsel %vm24, %v298, 0.0
  %317 = vadd.xlane.f32.xlu0 %v316
  %v318 = vpop.xlane.xlu0 %317
  %v319 = vsel %vm24, %v299, 0.0
  %320 = vadd.xlane.f32.xlu0 %v319
  %v321 = vpop.xlane.xlu0 %320
  %v322 = vsel %vm24, %v300, 0.0
  %323 = vadd.xlane.f32.xlu0 %v322
  %v324 = vpop.xlane.xlu0 %323
  %v325 = vsel %vm24, %v301, 0.0
  %326 = vadd.xlane.f32.xlu0 %v325
  %v327 = vpop.xlane.xlu0 %326
  %v328 = vsel %vm24, %v302, 0.0
  %329 = vadd.xlane.f32.xlu0 %v328
  %v330 = vpop.xlane.xlu0 %329
  %v331 = vsel %vm24, %v303, 0.0
  %332 = vadd.xlane.f32.xlu0 %v331
  %v333 = vpop.xlane.xlu0 %332
  %v334 = vsel %vm24, %v304, 0.0
  %335 = vadd.xlane.f32.xlu0 %v334
  %v336 = vpop.xlane.xlu0 %335
  %v337 = vsel %vm24, %v305, 0.0
  %338 = vadd.xlane.f32.xlu0 %v337
  %v339 = vpop.xlane.xlu0 %338
  %v340 = vsel %vm24, %v306, 0.0
  %341 = vadd.xlane.f32.xlu0 %v340
  %v342 = vpop.xlane.xlu0 %341
  %v343 = vsel %vm24, %v307, 0.0
  %344 = vadd.xlane.f32.xlu0 %v343
  %v345 = vpop.xlane.xlu0 %344
  %v346 = vsel %vm24, %v308, 0.0
  %347 = vadd.xlane.f32.xlu0 %v346
  %v348 = vpop.xlane.xlu0 %347
  %v349 = vsel %vm24, %v309, 0.0
  %350 = vadd.xlane.f32.xlu0 %v349
  %v351 = vpop.xlane.xlu0 %350
  %v352 = vsel %vm24, %v310, 0.0
  %353 = vadd.xlane.f32.xlu0 %v352
  %v354 = vpop.xlane.xlu0 %353
  %v355 = vsel %vm24, %v311, 0.0
  %356 = vadd.xlane.f32.xlu0 %v355
  %v357 = vpop.xlane.xlu0 %356
  %v358 = vsel %vm24, %v312, 0.0
  %359 = vadd.xlane.f32.xlu0 %v358
  %v360 = vpop.xlane.xlu0 %359
  %v377 = vlaneseq
  %v378 = vand.u32 %v377, 127
  %v379 = vlaneseq
  %v380 = vshrl.u32 %v379, 7
  %v381 = vsub.s32 %v378, %v380
  %v382 = vrot.slane %v315, %v381
  %v383 = vlaneseq
  %v384 = vshrl.u32 %v383, 7
  %v385 = vsub.s32 %v378, %v384
  %v386 = vrot.slane %v318, %v385
  %v387 = vlaneseq
  %v388 = vshrl.u32 %v387, 7
  %v389 = vsub.s32 %v378, %v388
  %v390 = vrot.slane %v321, %v389
  %v391 = vlaneseq
  %v392 = vshrl.u32 %v391, 7
  %v393 = vsub.s32 %v378, %v392
  %v394 = vrot.slane %v324, %v393
  %v395 = vlaneseq
  %v396 = vshrl.u32 %v395, 7
  %v397 = vsub.s32 %v378, %v396
  %v398 = vrot.slane %v327, %v397
  %v399 = vlaneseq
  %v400 = vshrl.u32 %v399, 7
  %v401 = vsub.s32 %v378, %v400
  %v402 = vrot.slane %v330, %v401
  %v403 = vlaneseq
  %v404 = vshrl.u32 %v403, 7
  %v405 = vsub.s32 %v378, %v404
  %v406 = vrot.slane %v333, %v405
  %v407 = vlaneseq
  %v408 = vshrl.u32 %v407, 7
  %v409 = vsub.s32 %v378, %v408
  %v410 = vrot.slane %v336, %v409
  %v411 = vlaneseq
  %v412 = vshrl.u32 %v411, 7
  %v413 = vsub.s32 %v378, %v412
  %v414 = vrot.slane %v339, %v413
  %v415 = vlaneseq
  %v416 = vshrl.u32 %v415, 7
  %v417 = vsub.s32 %v378, %v416
  %v418 = vrot.slane %v342, %v417
  %v419 = vlaneseq
  %v420 = vshrl.u32 %v419, 7
  %v421 = vsub.s32 %v378, %v420
  %v422 = vrot.slane %v345, %v421
  %v423 = vlaneseq
  %v424 = vshrl.u32 %v423, 7
  %v425 = vsub.s32 %v378, %v424
  %v426 = vrot.slane %v348, %v425
  %v427 = vlaneseq
  %v428 = vshrl.u32 %v427, 7
  %v429 = vsub.s32 %v378, %v428
  %v430 = vrot.slane %v351, %v429
  %v431 = vlaneseq
  %v432 = vshrl.u32 %v431, 7
  %v433 = vsub.s32 %v378, %v432
  %v434 = vrot.slane %v354, %v433
  %v435 = vlaneseq
  %v436 = vshrl.u32 %v435, 7
  %v437 = vsub.s32 %v378, %v436
  %v438 = vrot.slane %v357, %v437
  %v439 = vlaneseq
  %v440 = vshrl.u32 %v439, 7
  %v441 = vsub.s32 %v378, %v440
  %v442 = vrot.slane %v360, %v441
  %vm443 = vcmask 1041409
  %v444 = vsel %vm443, %v386, %v382
  %vm445 = vcmask 1042434
  %v446 = vsel %vm445, %v390, %v444
  %vm447 = vcmask 1043459
  %v448 = vsel %vm447, %v394, %v446
  %vm449 = vcmask 1044484
  %v450 = vsel %vm449, %v398, %v448
  %vm451 = vcmask 1045509
  %v452 = vsel %vm451, %v402, %v450
  %vm453 = vcmask 1046534
  %v454 = vsel %vm453, %v406, %v452
  %vm455 = vcmask 1047559
  %v456 = vsel %vm455, %v410, %v454
  %v457 = vsel %vm443, %v418, %v414
  %v458 = vsel %vm445, %v422, %v457
  %v459 = vsel %vm447, %v426, %v458
  %v460 = vsel %vm449, %v430, %v459
  %v461 = vsel %vm451, %v434, %v460
  %v462 = vsel %vm453, %v438, %v461
  %v463 = vsel %vm455, %v442, %v462
  %vm466 = vcmask 64512
  %467 = vst.msk [vmem:[%s1] sm:$0xff] %vm466, %v456
  %468 = vst.msk [vmem:[%s1 + $0x8] sm:$0xff] %vm466, %v463
  // Predicated region
  $region6: #{tpu_custom_call.1} parent=0 // pred_check
    _
  $region7: #{tpu_custom_call.1} parent=0 // pred_check_branch
    %470 = sbr.rel (0) target = $region9
  $region8: #{tpu_custom_call.1} parent=0 // pred_region
    _
  $region9: #{tpu_custom_call.1} parent=0 // pred_fallthru
    _
  // Predicated region
  $region10: #{tpu_custom_call.1} parent=0 // pred_check
    _
  $region11: #{tpu_custom_call.1} parent=0 // pred_check_branch
    %472 = sbr.rel (0) target = $region13
  $region12: #{tpu_custom_call.1} parent=0 // pred_region
    _
  $region13: #{tpu_custom_call.1} parent=0 // pred_fallthru
    _

</llo_original>
